<compile_context>
chip_gen: v7x
topology: tpu7x:2x2x1
jax: 0.10.0
libtpu: 0.0.40
codegen_flags: <defaults>
</compile_context>

<pallas_src>
import jax
import jax.numpy as jnp
from jax import lax
from jax.experimental import pallas as pl
from jax.experimental.pallas import tpu as pltpu


def _one_model_kernel(x_ref, w_ref, b_ref, o_ref, acc_ref):
    # x_ref  : [tm, tk]   (VMEM) activation tile
    # w_ref  : [tn, tk]   (VMEM) Linear weight tile in its native [D_OUT, D_IN] layout
    # b_ref  : [1,  tn]   (VMEM) bias tile
    # o_ref  : [tm, tn]   (VMEM) output tile
    # acc_ref: [tm, tn]   f32 accumulator scratch (resident across the K axis)
    k = pl.program_id(2)

    @pl.when(k == 0)
    def _():
        acc_ref[...] = jnp.zeros_like(acc_ref)

    # Contract x axis 1 against w axis 1 -> [tm, tn]; MXU consumes either orientation,
    # so no wrapper-side transpose of the weight is needed.
    acc_ref[...] += lax.dot_general(
        x_ref[...], w_ref[...],
        dimension_numbers=(((1,), (1,)), ((), ())),
        preferred_element_type=jnp.float32,
    )

    @pl.when(k == pl.num_programs(2) - 1)
    def _():
        # Fused epilogue: bias add (broadcast once, only at finalize) + exp on the f32
        # accumulator. exp lowers to the EUP slot and overlaps with MXU work.
        y = acc_ref[...] + b_ref[...]
        o_ref[...] = jnp.exp(y).astype(o_ref.dtype)


def one_model_forward(x, weight, bias, *, tm=128, tn=128, tk=128):
    """x: [B, D_IN]; weight: [D_OUT, D_IN] (PyTorch Linear layout); bias: [D_OUT].

    Returns exp(x @ weight.T + bias), shape [B, D_OUT].
    """
    B, D_IN = x.shape
    D_OUT = weight.shape[0]

    # Pad to tile multiples (lane-dense / (8,128)-aligned). Zero padding on K contributes
    # nothing to the matmul; padded M/N rows/cols are sliced off afterwards. This is a
    # no-op for already-aligned shapes (the intended fast path).
    Mp = pl.cdiv(B, tm) * tm
    Kp = pl.cdiv(D_IN, tk) * tk
    Np = pl.cdiv(D_OUT, tn) * tn

    xp = x if (Mp == B and Kp == D_IN) else jnp.pad(x, ((0, Mp - B), (0, Kp - D_IN)))
    wp = weight if (Np == D_OUT and Kp == D_IN) else jnp.pad(
        weight, ((0, Np - D_OUT), (0, Kp - D_IN)))
    bp = bias if Np == D_OUT else jnp.pad(bias, (0, Np - D_OUT))
    b2 = bp.reshape(1, Np)

    grid = (Mp // tm, Np // tn, Kp // tk)

    cost = pl.CostEstimate(
        flops=2 * Mp * Np * Kp,
        transcendentals=Mp * Np,
        bytes_accessed=4 * (Mp * Kp + Np * Kp + Np + Mp * Np),
    )

    out = pl.pallas_call(
        _one_model_kernel,
        out_shape=jax.ShapeDtypeStruct((Mp, Np), x.dtype),
        grid_spec=pltpu.PrefetchScalarGridSpec(
            num_scalar_prefetch=0,
            grid=grid,
            in_specs=[
                pl.BlockSpec((tm, tk), lambda i, j, k: (i, k)),   # x tile
                pl.BlockSpec((tn, tk), lambda i, j, k: (j, k)),   # weight tile (native layout)
                pl.BlockSpec((1, tn), lambda i, j, k: (0, j)),    # bias tile
            ],
            out_specs=pl.BlockSpec((tm, tn), lambda i, j, k: (i, j)),
            scratch_shapes=[pltpu.VMEM((tm, tn), jnp.float32)],
        ),
        compiler_params=pltpu.CompilerParams(
            # M/N parallel -> v7x's 2 TCs can split them; K is the reduction axis.
            dimension_semantics=("parallel", "parallel", "arbitrary"),
            # Explicit, conservative limit: fits v5e/v6e/v7x; per-step working set is
            # 2 bufs x 3 x 64 KiB tiles << 32 MiB, so double-buffering stays resident.
            vmem_limit_bytes=32 * 1024 * 1024,
        ),
        cost_estimate=cost,
    )(xp, wp, b2)

    if Mp == B and Np == D_OUT:
        return out
    return out[:B, :D_OUT]


if __name__ == "__main__":
    key = jax.random.PRNGKey(0)
    k_x, k_w, k_b = jax.random.split(key, 3)

    # Lane-dense, tile-aligned shapes (multiples of 128) so the kernel exercises the
    # full (M, N, K) tiled grid with unmasked stores, while staying small/fast.
    B, D_IN, D_OUT = 256, 256, 256

    # Deterministic, PyTorch-Linear-like init (uniform in +/- 1/sqrt(fan_in)).
    bound = 1.0 / jnp.sqrt(jnp.float32(D_IN))
    x = jax.random.normal(k_x, (B, D_IN), dtype=jnp.float32)
    weight = jax.random.uniform(k_w, (D_OUT, D_IN), dtype=jnp.float32,
                                minval=-bound, maxval=bound)
    bias = jax.random.uniform(k_b, (D_OUT,), dtype=jnp.float32,
                              minval=-bound, maxval=bound)

    out = one_model_forward(x, weight, bias)
    out = jax.block_until_ready(out)

    # Pure-JAX reference of the composed forward: exp(linear(x)).
    ref = jnp.exp(x @ weight.T + bias)
    assert out.shape == (B, D_OUT)
    assert jnp.allclose(out, ref, rtol=2e-5, atol=2e-5)

    print("KERNEL_OK")
</pallas_src>

<mosaic_0001>
module attributes {stable_mosaic.version = 11 : i64} {
  func.func @_one_model_kernel(%arg0: i32, %arg1: i32, %arg2: i32, %arg3: memref<128x128xf32, #tpu.memory_space<vmem>>, %arg4: memref<128x128xf32, #tpu.memory_space<vmem>>, %arg5: memref<1x128xf32, #tpu.memory_space<vmem>>, %arg6: memref<128x128xf32, #tpu.memory_space<vmem>>, %arg7: memref<128x128xf32, #tpu.memory_space<vmem>>) attributes {dimension_semantics = [#tpu.dimension_semantics<parallel>, #tpu.dimension_semantics<parallel>, #tpu.dimension_semantics<arbitrary>], iteration_bounds = array<i64: 2, 2, 2>, scalar_prefetch = 0 : i64, scratch_operands = 1 : i64, tpu.core_type = #tpu.core_type<tc>, window_params = [{transform_indices = @transform_0, window_bounds = array<i64: 128, 128>}, {transform_indices = @transform_1, window_bounds = array<i64: 128, 128>}, {transform_indices = @transform_2, window_bounds = array<i64: 1, 128>}, {transform_indices = @transform_3, window_bounds = array<i64: 128, 128>}]} {
    %c0_i32 = arith.constant 0 : i32
    %0 = arith.cmpi eq, %arg2, %c0_i32 : i32
    %1 = arith.extui %0 : i1 to i32
    %c0_i32_0 = arith.constant 0 : i32
    %2 = arith.cmpi ne, %1, %c0_i32_0 : i32
    scf.if %2 {
      %cst_9 = arith.constant 0.000000e+00 : f32
      %12 = vector.broadcast %cst_9 : f32 to vector<128x128xf32>
      %c0_10 = arith.constant 0 : index
      %c0_11 = arith.constant 0 : index
      %13 = vector.load %arg7[%c0_10, %c0_11] : memref<128x128xf32, #tpu.memory_space<vmem>>, vector<128x128xf32>
      tpu.vector_store %arg7[%c0_10, %c0_11], %12 {strides = array<i32>} : memref<128x128xf32, #tpu.memory_space<vmem>>, vector<128x128xf32>,
    } else {
    }
    %c0 = arith.constant 0 : index
    %c0_1 = arith.constant 0 : index
    %3 = vector.load %arg7[%c0, %c0_1] : memref<128x128xf32, #tpu.memory_space<vmem>>, vector<128x128xf32>
    %c0_2 = arith.constant 0 : index
    %c0_3 = arith.constant 0 : index
    %4 = vector.load %arg3[%c0_2, %c0_3] : memref<128x128xf32, #tpu.memory_space<vmem>>, vector<128x128xf32>
    %c0_4 = arith.constant 0 : index
    %c0_5 = arith.constant 0 : index
    %5 = vector.load %arg4[%c0_4, %c0_5] : memref<128x128xf32, #tpu.memory_space<vmem>>, vector<128x128xf32>
    %cst = arith.constant dense<0.000000e+00> : vector<128x128xf32>
    %6 = tpu.matmul %4, %5, %cst {dimension_numbers = #tpu.dot_dimension_numbers<[1], [1], [0], [0], [0, 0, 1, 0], [], []>} : vector<128x128xf32>, vector<128x128xf32>, vector<128x128xf32> -> vector<128x128xf32>
    %7 = arith.addf %3, %6 : vector<128x128xf32>
    %c0_6 = arith.constant 0 : index
    %c0_7 = arith.constant 0 : index
    %8 = vector.load %arg7[%c0_6, %c0_7] : memref<128x128xf32, #tpu.memory_space<vmem>>, vector<128x128xf32>
    tpu.vector_store %arg7[%c0_6, %c0_7], %7 {strides = array<i32>} : memref<128x128xf32, #tpu.memory_space<vmem>>, vector<128x128xf32>,
    %c1_i32 = arith.constant 1 : i32
    %9 = arith.cmpi eq, %arg2, %c1_i32 : i32
    %10 = arith.extui %9 : i1 to i32
    %c0_i32_8 = arith.constant 0 : i32
    %11 = arith.cmpi ne, %10, %c0_i32_8 : i32
    scf.if %11 {
      %c0_9 = arith.constant 0 : index
      %c0_10 = arith.constant 0 : index
      %12 = vector.load %arg7[%c0_9, %c0_10] : memref<128x128xf32, #tpu.memory_space<vmem>>, vector<128x128xf32>
      %c0_11 = arith.constant 0 : index
      %c0_12 = arith.constant 0 : index
      %13 = vector.load %arg5[%c0_11, %c0_12] : memref<1x128xf32, #tpu.memory_space<vmem>>, vector<1x128xf32>
      %14 = vector.broadcast %13 : vector<1x128xf32> to vector<128x128xf32>
      %15 = arith.addf %12, %14 : vector<128x128xf32>
      %16 = math.exp %15 : vector<128x128xf32>
      %c0_13 = arith.constant 0 : index
      %c0_14 = arith.constant 0 : index
      %17 = vector.load %arg6[%c0_13, %c0_14] : memref<128x128xf32, #tpu.memory_space<vmem>>, vector<128x128xf32>
      tpu.vector_store %arg6[%c0_13, %c0_14], %16 {strides = array<i32>} : memref<128x128xf32, #tpu.memory_space<vmem>>, vector<128x128xf32>,
    } else {
    }
    return
  }
  func.func @transform_0(%arg0: i32, %arg1: i32, %arg2: i32) -> (i32, i32) {
    %c0_i32 = arith.constant 0 : i32
    return %arg0, %arg2 : i32, i32
  }
  func.func @transform_1(%arg0: i32, %arg1: i32, %arg2: i32) -> (i32, i32) {
    %c0_i32 = arith.constant 0 : i32
    return %arg1, %arg2 : i32, i32
  }
  func.func @transform_2(%arg0: i32, %arg1: i32, %arg2: i32) -> (i32, i32) {
    %c0_i32 = arith.constant 0 : i32
    %c0_i32_0 = arith.constant 0 : i32
    return %c0_i32, %arg1 : i32, i32
  }
  func.func @transform_3(%arg0: i32, %arg1: i32, %arg2: i32) -> (i32, i32) {
    %c0_i32 = arith.constant 0 : i32
    return %arg0, %arg1 : i32, i32
  }
}

</mosaic_0001>

<llo_original>
// kernel: tpu_custom_call.1
$region0: #{tpu_custom_call.1}
  #allocation0 [shape = 'u32[]', space=smem, size = 0x4, offset = 0x4, fixed_abs, tag = 'smem constant byte address 0x4 - core index']
  #allocation1 [shape = 'u32[144,128]{1,0:T(1,128)}', space=vmem, size = 0x12000, scoped, tag = 'internal scratch']
  #allocation2 [shape = 'f32[128,128]{1,0:T(8,128)}', space=vmem, size = 0x10000, scoped, tag = 'scratch operand']
  %s0 = inlined_call_operand.hbm [shape: f32[256,256], index: 0, kind: input, shape index: {}]
  %s1 = inlined_call_operand.hbm [shape: f32[256,256], index: 1, kind: input, shape index: {}]
  %s2 = inlined_call_operand.vmem [shape: f32[1,256], index: 2, kind: input, shape index: {}]
  %s3 = inlined_call_operand.hbm [shape: f32[256,256], index: 3, kind: output, shape index: {}]
  %s4 = sld [smem:[#allocation0]]
  $region61: #{tpu_custom_call.1} parent=0
    _
  %s6 = ssub.s32 1, %s4
  %s7 = scalar_select 0, %s6, %s4
  $region1: #{tpu_custom_call.1} parent=0
    #allocation3 [shape = 'u8[131072]{0}', space=vmem, size = 0x20000, scoped, tag = 'input window, operand 0']
    #allocation4 [shape = 's32[2]{0}', space=sflag, size = 0x8, scoped, tag = 'scoped memory for tpu_custom_call.1']
    #allocation5 [shape = 's32[2]{0}', space=sflag, size = 0x8, scoped, tag = 'scoped memory for tpu_custom_call.1']
    #allocation6 [shape = 'u8[131072]{0}', space=vmem, size = 0x20000, scoped, tag = 'input window, operand 1']
    #allocation7 [shape = 's32[2]{0}', space=sflag, size = 0x8, scoped, tag = 'scoped memory for tpu_custom_call.1']
    #allocation8 [shape = 'u8[131072]{0}', space=vmem, size = 0x20000, scoped, tag = 'output window, operand 0']
    %8 = vsyncpa [#allocation4], 0
    %s9 = scalar_lea.sflag [#allocation4], 1
    %10 = vsyncpa %s9, 0
    %11 = vsyncpa [#allocation7], 0
    %s12 = scalar_lea.sflag [#allocation7], 1
    %13 = vsyncpa %s12, 0
    %14 = vsyncpa [#allocation5], 0
    %s15 = scalar_lea.sflag [#allocation5], 1
    %16 = vsyncpa %s15, 0
    loop: start=0, step=1, limit=10
    $region2: #{tpu_custom_call.1} parent=1 // loop_pre_header
      _
    $region3: #{tpu_custom_call.1} parent=1 // loop_header
      %s18 = sphi 0, %s22
      %p19 = scmp.ge.s32.totalorder %s18, 10
      %s25 = sphi 0, %s44
      %s26 = sphi 0, %s40
      %s27 = sphi 0, %s36
      %s28 = sphi 0, %s25
      %s29 = sphi 0, %s26
      %s30 = sphi 0, %s27
      %s31 = sphi 0, %s28
      %s32 = sphi 0, %s29
      %s33 = sphi 0, %s30
      %s49 = sphi 0, %s51
      %s52 = sphi 0, %s49
      %s53 = sphi 0, %s52
      %s69 = sphi 0, %s53
      %s77 = sphi 0, %s79
      %s80 = sphi 0, %s77
      %s81 = sphi 0, %s80
      %s97 = sphi 0, %s81
      %s103 = sphi 0, %s105
      %s106 = sphi 0, %s103
      %s107 = sphi 0, %s106
      %s123 = sphi 0, %s107
      %s131 = sphi 0, %s133
      %s134 = sphi 0, %s131
      %s135 = sphi 0, %s134
      %s151 = sphi 0, %s135
    $region4: #{tpu_custom_call.1} parent=1 // loop_header_branch
      %21 = sbr.rel (%p19) target = $region8
    $region5: #{tpu_custom_call.1} parent=1 // loop_body
      %s23 = ssub.s32 %s18, 1
      %s24 = ssub.s32 %s18, 2
      %s34 = sadd.s32 1, %s27
      %p35 = scmp.ge.s32.totalorder %s34, 2
      %s36 = scalar_select %p35, 0, %s34
      %s37 = sadd.s32 1, %s26
      %s38 = scalar_select %p35, %s37, %s26
      %p39 = scmp.ge.s32.totalorder %s38, 2
      %s40 = scalar_select %p39, 0, %s38
      %s41 = sadd.s32 1, %s25
      %s42 = scalar_select %p39, %s41, %s25
      %p43 = scmp.ge.s32.totalorder %s42, 2
      %s44 = scalar_select %p43, 0, %s42
      %s45 = ssub.s32 %s25, %s44
      %s46 = ssub.s32 %s27, %s36
      %s47 = sor.u32 %s45, %s46
      %p48 = scmp.eq.s32.totalorder %s47, 0
      %s50 = sadd.s32 %s49, 1
      %s51 = scalar_select %p48, %s49, %s50
      %p54 = pneg %p48
      %p55 = scmp.eq.s32.totalorder %s18, 7
      %p56 = por %p54, %p55
      %p57 = scmp.ne.s32.totalorder %s49, %s52
      %p58 = scmp.eq.s32.totalorder %s18, 0
      %p59 = por %p57, %p58
      %p60 = scmp.ne.s32.totalorder %s49, %s52
      %p61 = scmp.eq.s32.totalorder %s23, 7
      %p62 = por %p60, %p61
      %p63 = scmp.ne.s32.totalorder %s52, %s53
      %p64 = scmp.eq.s32.totalorder %s23, 0
      %p65 = por %p63, %p64
      %p66 = scmp.ne.s32.totalorder %s52, %s53
      %p67 = scmp.eq.s32.totalorder %s24, 7
      %p68 = por %p66, %p67
      %p70 = scmp.ne.s32.totalorder %s53, %s69
      %p71 = scmp.eq.s32.totalorder %s24, 0
      %p72 = por %p70, %p71
      %s73 = ssub.s32 %s26, %s40
      %s74 = ssub.s32 %s27, %s36
      %s75 = sor.u32 %s73, %s74
      %p76 = scmp.eq.s32.totalorder %s75, 0
      %s78 = sadd.s32 %s77, 1
      %s79 = scalar_select %p76, %s77, %s78
      %p82 = pneg %p76
      %p83 = scmp.eq.s32.totalorder %s18, 7
      %p84 = por %p82, %p83
      %p85 = scmp.ne.s32.totalorder %s77, %s80
      %p86 = scmp.eq.s32.totalorder %s18, 0
      %p87 = por %p85, %p86
      %p88 = scmp.ne.s32.totalorder %s77, %s80
      %p89 = scmp.eq.s32.totalorder %s23, 7
      %p90 = por %p88, %p89
      %p91 = scmp.ne.s32.totalorder %s80, %s81
      %p92 = scmp.eq.s32.totalorder %s23, 0
      %p93 = por %p91, %p92
      %p94 = scmp.ne.s32.totalorder %s80, %s81
      %p95 = scmp.eq.s32.totalorder %s24, 7
      %p96 = por %p94, %p95
      %p98 = scmp.ne.s32.totalorder %s81, %s97
      %p99 = scmp.eq.s32.totalorder %s24, 0
      %p100 = por %p98, %p99
      %s101 = ssub.s32 %s26, %s40
      %p102 = scmp.eq.s32.totalorder %s101, 0
      %s104 = sadd.s32 %s103, 1
      %s105 = scalar_select %p102, %s103, %s104
      %p108 = pneg %p102
      %p109 = scmp.eq.s32.totalorder %s18, 7
      %p110 = por %p108, %p109
      %p111 = scmp.ne.s32.totalorder %s103, %s106
      %p112 = scmp.eq.s32.totalorder %s18, 0
      %p113 = por %p111, %p112
      %p114 = scmp.ne.s32.totalorder %s103, %s106
      %p115 = scmp.eq.s32.totalorder %s23, 7
      %p116 = por %p114, %p115
      %p117 = scmp.ne.s32.totalorder %s106, %s107
      %p118 = scmp.eq.s32.totalorder %s23, 0
      %p119 = por %p117, %p118
      %p120 = scmp.ne.s32.totalorder %s106, %s107
      %p121 = scmp.eq.s32.totalorder %s24, 7
      %p122 = por %p120, %p121
      %p124 = scmp.ne.s32.totalorder %s107, %s123
      %p125 = scmp.eq.s32.totalorder %s24, 0
      %p126 = por %p124, %p125
      %s127 = ssub.s32 %s25, %s44
      %s128 = ssub.s32 %s26, %s40
      %s129 = sor.u32 %s127, %s128
      %p130 = scmp.eq.s32.totalorder %s129, 0
      %s132 = sadd.s32 %s131, 1
      %s133 = scalar_select %p130, %s131, %s132
      %p136 = pneg %p130
      %p137 = scmp.eq.s32.totalorder %s18, 7
      %p138 = por %p136, %p137
      %p139 = scmp.ne.s32.totalorder %s131, %s134
      %p140 = scmp.eq.s32.totalorder %s18, 0
      %p141 = por %p139, %p140
      %p142 = scmp.ne.s32.totalorder %s131, %s134
      %p143 = scmp.eq.s32.totalorder %s23, 7
      %p144 = por %p142, %p143
      %p145 = scmp.ne.s32.totalorder %s134, %s135
      %p146 = scmp.eq.s32.totalorder %s23, 0
      %p147 = por %p145, %p146
      %p148 = scmp.ne.s32.totalorder %s134, %s135
      %p149 = scmp.eq.s32.totalorder %s24, 7
      %p150 = por %p148, %p149
      %p152 = scmp.ne.s32.totalorder %s135, %s151
      %p153 = scmp.eq.s32.totalorder %s24, 0
      %p154 = por %p152, %p153
      %p155 = scmp.le.s32.totalorder 1, %s18
      %p156 = scmp.lt.s32.totalorder %s18, 9
      %p157 = pnand %p155, %p156
      %p158 = pneg %p157
      // Predicated region
      $region9: #{tpu_custom_call.1} parent=5 // pred_check
        _
      $region10: #{tpu_custom_call.1} parent=5 // pred_check_branch
        %160 = sbr.rel (%p157) target = $region12
      $region11: #{tpu_custom_call.1} parent=5 // pred_region
        %s161 = ssub.s32 %s18, 1
      $region12: #{tpu_custom_call.1} parent=5 // pred_fallthru
        _
      %p162 = scmp.lt.s32.totalorder %s18, 8
      // Predicated region
      $region13: #{tpu_custom_call.1} parent=5 // pred_check
        %p163 = pneg %p162
      $region14: #{tpu_custom_call.1} parent=5 // pred_check_branch
        %165 = sbr.rel (%p163) target = $region16
      $region15: #{tpu_custom_call.1} parent=5 // pred_region
        // Predicated region
        $region17: #{tpu_custom_call.1} parent=15 // pred_check
          %p166 = pneg %p59
        $region18: #{tpu_custom_call.1} parent=15 // pred_check_branch
          %168 = sbr.rel (%p166) target = $region20
        $region19: #{tpu_custom_call.1} parent=15 // pred_region
          %s169 = sand.u32 %s49, 1
          %s170 = scalar_lea.sflag [#allocation4], %s169
          %s171 = sand.u32 %s49, 1
          %s172 = smul.addr %s171, 128
          %s173 = scalar_lea.vmem [#allocation3], %s172
          %s174 = smul.u32 16, %s25
          %s176 = ssub.s32 2048, 2048
          %177 = vsyncadd %s170, %s176
          %s178 = smul.addr %s174, 2
          %s179 = sadd.s32 %s27, %s178
          %s180 = smul.addr %s179, 128
          %s181 = scalar_lea.hbm %s0, %s180
          %s182 = sshll.u32 %s173, 4
          %s183 = int_to_ptr.vmem [resolvable:$true] %s182
          %188 = dma.hbm_to_vmem [thread:$0]  %s181, 2048, %s183, %s170, 256, 128, 8
        $region20: #{tpu_custom_call.1} parent=15 // pred_fallthru
          _
        // Predicated region
        $region21: #{tpu_custom_call.1} parent=15 // pred_check
          %p189 = pneg %p87
        $region22: #{tpu_custom_call.1} parent=15 // pred_check_branch
          %191 = sbr.rel (%p189) target = $region24
        $region23: #{tpu_custom_call.1} parent=15 // pred_region
          %s192 = sand.u32 %s77, 1
          %s193 = scalar_lea.sflag [#allocation7], %s192
          %s194 = sand.u32 %s77, 1
          %s195 = smul.addr %s194, 128
          %s196 = scalar_lea.vmem [#allocation6], %s195
          %s197 = smul.u32 16, %s26
          %s199 = ssub.s32 2048, 2048
          %200 = vsyncadd %s193, %s199
          %s201 = smul.addr %s197, 2
          %s202 = sadd.s32 %s27, %s201
          %s203 = smul.addr %s202, 128
          %s204 = scalar_lea.hbm %s1, %s203
          %s205 = sshll.u32 %s196, 4
          %s206 = int_to_ptr.vmem [resolvable:$true] %s205
          %211 = dma.hbm_to_vmem [thread:$0]  %s204, 2048, %s206, %s193, 256, 128, 8
        $region24: #{tpu_custom_call.1} parent=15 // pred_fallthru
          _
        // Predicated region
        $region25: #{tpu_custom_call.1} parent=15 // pred_check
          %p212 = pneg %p113
        $region26: #{tpu_custom_call.1} parent=15 // pred_check_branch
          %214 = sbr.rel (%p212) target = $region28
        $region27: #{tpu_custom_call.1} parent=15 // pred_region
          %p215 = scmp.lt.s32.totalorder %s26, 1
          %s216 = scalar_select %p215, %s26, 1
          %s217 = scalar_lea.vmem %s2, %s216
        $region28: #{tpu_custom_call.1} parent=15 // pred_fallthru
          _
      $region16: #{tpu_custom_call.1} parent=5 // pred_fallthru
        _
      %p218 = scmp.le.s32.totalorder 1, %s18
      %p219 = scmp.lt.s32.totalorder %s18, 9
      %p220 = pnand %p218, %p219
      %p221 = pneg %p220
      // Predicated region
      $region29: #{tpu_custom_call.1} parent=5 // pred_check
        _
      $region30: #{tpu_custom_call.1} parent=5 // pred_check_branch
        %223 = sbr.rel (%p220) target = $region32
      $region31: #{tpu_custom_call.1} parent=5 // pred_region
        %s224 = ssub.s32 %s18, 1
        %s225 = sand.u32 %s52, 1
        %s226 = scalar_lea.sflag [#allocation4], %s225
        %s227 = sand.u32 %s52, 1
        %s228 = smul.addr %s227, 128
        %s229 = scalar_lea.vmem [#allocation3], %s228
        // Predicated region
        $region33: #{tpu_custom_call.1} parent=31 // pred_check
          %p230 = pneg %p65
        $region34: #{tpu_custom_call.1} parent=31 // pred_check_branch
          %232 = sbr.rel (%p230) target = $region36
        $region35: #{tpu_custom_call.1} parent=31 // pred_region
          %233 = dma.done %s226, 2048
        $region36: #{tpu_custom_call.1} parent=31 // pred_fallthru
          _
        %s234 = sand.u32 %s80, 1
        %s235 = scalar_lea.sflag [#allocation7], %s234
        %s236 = sand.u32 %s80, 1
        %s237 = smul.addr %s236, 128
        %s238 = scalar_lea.vmem [#allocation6], %s237
        // Predicated region
        $region37: #{tpu_custom_call.1} parent=31 // pred_check
          %p239 = pneg %p93
        $region38: #{tpu_custom_call.1} parent=31 // pred_check_branch
          %241 = sbr.rel (%p239) target = $region40
        $region39: #{tpu_custom_call.1} parent=31 // pred_region
          %242 = dma.done %s235, 2048
        $region40: #{tpu_custom_call.1} parent=31 // pred_fallthru
          _
        %s243 = sand.u32 %s52, 1
        %s244 = scalar_lea.sflag [#allocation4], %s243
        %s245 = sand.u32 %s52, 1
        %s246 = smul.addr %s245, 128
        %s247 = scalar_lea.vmem [#allocation3], %s246
        %p248 = pneg %p65
        %p249 = pneg %p62
        %s250 = sand.u32 %s80, 1
        %s251 = scalar_lea.sflag [#allocation7], %s250
        %s252 = sand.u32 %s80, 1
        %s253 = smul.addr %s252, 128
        %s254 = scalar_lea.vmem [#allocation6], %s253
        %p255 = pneg %p93
        %p256 = pneg %p90
        %p257 = scmp.lt.s32.totalorder %s29, 1
        %s258 = scalar_select %p257, %s29, 1
        %s259 = scalar_lea.vmem %s2, %s258
        %p260 = pneg %p119
        %p261 = pneg %p116
        %p262 = pneg %p147
        %p263 = pneg %p144
        %s264 = sand.u32 %s134, 1
        %s265 = scalar_lea.sflag [#allocation5], %s264
        %s266 = sand.u32 %s134, 1
        %s267 = smul.addr %s266, 128
        %s268 = scalar_lea.vmem [#allocation8], %s267
        %s269 = smul.u32 16, %s28
        %s270 = smul.u32 16, %s29
        %p271 = scmp.lt.s32.totalorder %s29, 1
        %s272 = scalar_select %p271, %s29, 1
        %s273 = scalar_lea.vmem %s2, %s272
        %s274 = smul.u32 16, %s28
        %p275 = scmp.eq.s32.totalorder %s30, 0
        // Predicated region
        $region41: #{tpu_custom_call.1} parent=31 // pred_check
          %p276 = pneg %p275
        $region42: #{tpu_custom_call.1} parent=31 // pred_check_branch
          %278 = sbr.rel (%p276) target = $region44
        $region43: #{tpu_custom_call.1} parent=31 // pred_region
          %279 = vst [vmem:[#allocation2] sm:$0xff] 0.0
          %280 = vst [vmem:[#allocation2 + $0x8] sm:$0xff] 0.0
          %281 = vst [vmem:[#allocation2 + $0x10] sm:$0xff] 0.0
          %282 = vst [vmem:[#allocation2 + $0x18] sm:$0xff] 0.0
          %283 = vst [vmem:[#allocation2 + $0x20] sm:$0xff] 0.0
          %284 = vst [vmem:[#allocation2 + $0x28] sm:$0xff] 0.0
          %285 = vst [vmem:[#allocation2 + $0x30] sm:$0xff] 0.0
          %286 = vst [vmem:[#allocation2 + $0x38] sm:$0xff] 0.0
          %287 = vst [vmem:[#allocation2 + $0x40] sm:$0xff] 0.0
          %288 = vst [vmem:[#allocation2 + $0x48] sm:$0xff] 0.0
          %289 = vst [vmem:[#allocation2 + $0x50] sm:$0xff] 0.0
          %290 = vst [vmem:[#allocation2 + $0x58] sm:$0xff] 0.0
          %291 = vst [vmem:[#allocation2 + $0x60] sm:$0xff] 0.0
          %292 = vst [vmem:[#allocation2 + $0x68] sm:$0xff] 0.0
          %293 = vst [vmem:[#allocation2 + $0x70] sm:$0xff] 0.0
          %294 = vst [vmem:[#allocation2 + $0x78] sm:$0xff] 0.0
        $region44: #{tpu_custom_call.1} parent=31 // pred_fallthru
          _
        %v295 = vld [vmem:[#allocation2] sm:$0xff]
        %v296 = vld [vmem:[#allocation2 + $0x8] sm:$0xff]
        %v297 = vld [vmem:[#allocation2 + $0x10] sm:$0xff]
        %v298 = vld [vmem:[#allocation2 + $0x18] sm:$0xff]
        %v299 = vld [vmem:[#allocation2 + $0x20] sm:$0xff]
        %v300 = vld [vmem:[#allocation2 + $0x28] sm:$0xff]
        %v301 = vld [vmem:[#allocation2 + $0x30] sm:$0xff]
        %v302 = vld [vmem:[#allocation2 + $0x38] sm:$0xff]
        %v303 = vld [vmem:[#allocation2 + $0x40] sm:$0xff]
        %v304 = vld [vmem:[#allocation2 + $0x48] sm:$0xff]
        %v305 = vld [vmem:[#allocation2 + $0x50] sm:$0xff]
        %v306 = vld [vmem:[#allocation2 + $0x58] sm:$0xff]
        %v307 = vld [vmem:[#allocation2 + $0x60] sm:$0xff]
        %v308 = vld [vmem:[#allocation2 + $0x68] sm:$0xff]
        %v309 = vld [vmem:[#allocation2 + $0x70] sm:$0xff]
        %v310 = vld [vmem:[#allocation2 + $0x78] sm:$0xff]
        %v311 = vld [vmem:[%s229] sm:$0xff]
        %v312 = vld [vmem:[%s229 + $0x8] sm:$0xff]
        %v313 = vld [vmem:[%s229 + $0x10] sm:$0xff]
        %v314 = vld [vmem:[%s229 + $0x18] sm:$0xff]
        %v315 = vld [vmem:[%s229 + $0x20] sm:$0xff]
        %v316 = vld [vmem:[%s229 + $0x28] sm:$0xff]
        %v317 = vld [vmem:[%s229 + $0x30] sm:$0xff]
        %v318 = vld [vmem:[%s229 + $0x38] sm:$0xff]
        %v319 = vld [vmem:[%s229 + $0x40] sm:$0xff]
        %v320 = vld [vmem:[%s229 + $0x48] sm:$0xff]
        %v321 = vld [vmem:[%s229 + $0x50] sm:$0xff]
        %v322 = vld [vmem:[%s229 + $0x58] sm:$0xff]
        %v323 = vld [vmem:[%s229 + $0x60] sm:$0xff]
        %v324 = vld [vmem:[%s229 + $0x68] sm:$0xff]
        %v325 = vld [vmem:[%s229 + $0x70] sm:$0xff]
        %v326 = vld [vmem:[%s229 + $0x78] sm:$0xff]
        %v327 = vld [vmem:[%s238] sm:$0xff]
        %v328 = vld [vmem:[%s238 + $0x8] sm:$0xff]
        %v329 = vld [vmem:[%s238 + $0x10] sm:$0xff]
        %v330 = vld [vmem:[%s238 + $0x18] sm:$0xff]
        %v331 = vld [vmem:[%s238 + $0x20] sm:$0xff]
        %v332 = vld [vmem:[%s238 + $0x28] sm:$0xff]
        %v333 = vld [vmem:[%s238 + $0x30] sm:$0xff]
        %v334 = vld [vmem:[%s238 + $0x38] sm:$0xff]
        %v335 = vld [vmem:[%s238 + $0x40] sm:$0xff]
        %v336 = vld [vmem:[%s238 + $0x48] sm:$0xff]
        %v337 = vld [vmem:[%s238 + $0x50] sm:$0xff]
        %v338 = vld [vmem:[%s238 + $0x58] sm:$0xff]
        %v339 = vld [vmem:[%s238 + $0x60] sm:$0xff]
        %v340 = vld [vmem:[%s238 + $0x68] sm:$0xff]
        %v341 = vld [vmem:[%s238 + $0x70] sm:$0xff]
        %v342 = vld [vmem:[%s238 + $0x78] sm:$0xff]
        %343 = vmatprep.subr.mxu0 0.0
        %344 = vmatpush1.xpose.msra.mxu0 %v327
        %345 = vmatprep.subr.mxu0 0.0
        %346 = vmatpush1.xpose.msra.mxu0 %v328
        %347 = vmatprep.subr.mxu0 0.0
        %348 = vmatpush1.xpose.msra.mxu0 %v329
        %349 = vmatprep.subr.mxu0 0.0
        %350 = vmatpush1.xpose.msra.mxu0 %v330
        %351 = vmatprep.subr.mxu0 0.0
        %352 = vmatpush1.xpose.msra.mxu0 %v331
        %353 = vmatprep.subr.mxu0 0.0
        %354 = vmatpush1.xpose.msra.mxu0 %v332
        %355 = vmatprep.subr.mxu0 0.0
        %356 = vmatpush1.xpose.msra.mxu0 %v333
        %357 = vmatprep.subr.mxu0 0.0
        %358 = vmatpush1.xpose.msra.mxu0 %v334
        %359 = vmatprep.subr.mxu0 0.0
        %360 = vmatpush1.xpose.msra.mxu0 %v335
        %361 = vmatprep.subr.mxu0 0.0
        %362 = vmatpush1.xpose.msra.mxu0 %v336
        %363 = vmatprep.subr.mxu0 0.0
        %364 = vmatpush1.xpose.msra.mxu0 %v337
        %365 = vmatprep.subr.mxu0 0.0
        %366 = vmatpush1.xpose.msra.mxu0 %v338
        %367 = vmatprep.subr.mxu0 0.0
        %368 = vmatpush1.xpose.msra.mxu0 %v339
        %369 = vmatprep.subr.mxu0 0.0
        %370 = vmatpush1.xpose.msra.mxu0 %v340
        %371 = vmatprep.subr.mxu0 0.0
        %372 = vmatpush1.xpose.msra.mxu0 %v341
        %373 = vmatprep.subr.mxu0 0.0
        %374 = vmatpush1.xpose.msra.mxu0 %v342
        %375 = vmatprep.subr.mxu0 0.0
        %376 = vmatpush1.xpose.msra.mxu0 0.0
        %377 = vmatprep.subr.mxu0 0.0
        %378 = vmatpush1.xpose.msra.mxu0 0.0
        %379 = vmatprep.subr.mxu0 0.0
        %380 = vmatpush1.xpose.msra.mxu0 0.0
        %381 = vmatprep.subr.mxu0 0.0
        %382 = vmatpush1.xpose.msra.mxu0 0.0
        %383 = vmatprep.subr.mxu0 0.0
        %384 = vmatpush1.xpose.msra.mxu0 0.0
        %385 = vmatprep.subr.mxu0 0.0
        %386 = vmatpush1.xpose.msra.mxu0 0.0
        %387 = vmatprep.subr.mxu0 0.0
        %388 = vmatpush1.xpose.msra.mxu0 0.0
        %389 = vmatprep.subr.mxu0 0.0
        %390 = vmatpush1.xpose.msra.mxu0 0.0
        %391 = vmatprep.subr.mxu0 0.0
        %392 = vmatpush1.xpose.msra.mxu0 0.0
        %393 = vmatprep.subr.mxu0 0.0
        %394 = vmatpush1.xpose.msra.mxu0 0.0
        %395 = vmatprep.subr.mxu0 0.0
        %396 = vmatpush1.xpose.msra.mxu0 0.0
        %397 = vmatprep.subr.mxu0 0.0
        %398 = vmatpush1.xpose.msra.mxu0 0.0
        %399 = vmatprep.subr.mxu0 0.0
        %400 = vmatpush1.xpose.msra.mxu0 0.0
        %401 = vmatprep.subr.mxu0 0.0
        %402 = vmatpush1.xpose.msra.mxu0 0.0
        %403 = vmatprep.subr.mxu0 0.0
        %404 = vmatpush1.xpose.msra.mxu0 0.0
        %405 = vmatprep.subr.mxu0 0.0
        %406 = vmatpush1.xpose.msra.mxu0 0.0
        %407 = vmatprep.mubr.f32.mxu0 0.0
        %408 = vmatmul.mubr.f32.gmra.mrb[0].mxu0 %v311
        %v409 = vpop.f32.mrb[0].mxu0
        %v410 = vadd.f32 0.0, %v409
        %v411 = vpop.f32.mrb[0].mxu0
        %412 = vmatprep.mubr.f32.mxu0 0.0
        %413 = vmatmul.mubr.f32.gmra.mrb[0].mxu0 %v312
        %v414 = vpop.f32.mrb[0].mxu0
        %v415 = vadd.f32 0.0, %v414
        %v416 = vpop.f32.mrb[0].mxu0
        %417 = vmatprep.mubr.f32.mxu0 0.0
        %418 = vmatmul.mubr.f32.gmra.mrb[0].mxu0 %v313
        %v419 = vpop.f32.mrb[0].mxu0
        %v420 = vadd.f32 0.0, %v419
        %v421 = vpop.f32.mrb[0].mxu0
        %422 = vmatprep.mubr.f32.mxu0 0.0
        %423 = vmatmul.mubr.f32.gmra.mrb[0].mxu0 %v314
        %v424 = vpop.f32.mrb[0].mxu0
        %v425 = vadd.f32 0.0, %v424
        %v426 = vpop.f32.mrb[0].mxu0
        %427 = vmatprep.mubr.f32.mxu0 0.0
        %428 = vmatmul.mubr.f32.gmra.mrb[0].mxu0 %v315
        %v429 = vpop.f32.mrb[0].mxu0
        %v430 = vadd.f32 0.0, %v429
        %v431 = vpop.f32.mrb[0].mxu0
        %432 = vmatprep.mubr.f32.mxu0 0.0
        %433 = vmatmul.mubr.f32.gmra.mrb[0].mxu0 %v316
        %v434 = vpop.f32.mrb[0].mxu0
        %v435 = vadd.f32 0.0, %v434
        %v436 = vpop.f32.mrb[0].mxu0
        %437 = vmatprep.mubr.f32.mxu0 0.0
        %438 = vmatmul.mubr.f32.gmra.mrb[0].mxu0 %v317
        %v439 = vpop.f32.mrb[0].mxu0
        %v440 = vadd.f32 0.0, %v439
        %v441 = vpop.f32.mrb[0].mxu0
        %442 = vmatprep.mubr.f32.mxu0 0.0
        %443 = vmatmul.mubr.f32.gmra.mrb[0].mxu0 %v318
        %v444 = vpop.f32.mrb[0].mxu0
        %v445 = vadd.f32 0.0, %v444
        %v446 = vpop.f32.mrb[0].mxu0
        %447 = vmatprep.mubr.f32.mxu0 0.0
        %448 = vmatmul.mubr.f32.gmra.mrb[0].mxu0 %v319
        %v449 = vpop.f32.mrb[0].mxu0
        %v450 = vadd.f32 0.0, %v449
        %v451 = vpop.f32.mrb[0].mxu0
        %452 = vmatprep.mubr.f32.mxu0 0.0
        %453 = vmatmul.mubr.f32.gmra.mrb[0].mxu0 %v320
        %v454 = vpop.f32.mrb[0].mxu0
        %v455 = vadd.f32 0.0, %v454
        %v456 = vpop.f32.mrb[0].mxu0
        %457 = vmatprep.mubr.f32.mxu0 0.0
        %458 = vmatmul.mubr.f32.gmra.mrb[0].mxu0 %v321
        %v459 = vpop.f32.mrb[0].mxu0
        %v460 = vadd.f32 0.0, %v459
        %v461 = vpop.f32.mrb[0].mxu0
        %462 = vmatprep.mubr.f32.mxu0 0.0
        %463 = vmatmul.mubr.f32.gmra.mrb[0].mxu0 %v322
        %v464 = vpop.f32.mrb[0].mxu0
        %v465 = vadd.f32 0.0, %v464
        %v466 = vpop.f32.mrb[0].mxu0
        %467 = vmatprep.mubr.f32.mxu0 0.0
        %468 = vmatmul.mubr.f32.gmra.mrb[0].mxu0 %v323
        %v469 = vpop.f32.mrb[0].mxu0
        %v470 = vadd.f32 0.0, %v469
        %v471 = vpop.f32.mrb[0].mxu0
        %472 = vmatprep.mubr.f32.mxu0 0.0
        %473 = vmatmul.mubr.f32.gmra.mrb[0].mxu0 %v324
        %v474 = vpop.f32.mrb[0].mxu0
        %v475 = vadd.f32 0.0, %v474
        %v476 = vpop.f32.mrb[0].mxu0
        %477 = vmatprep.mubr.f32.mxu0 0.0
        %478 = vmatmul.mubr.f32.gmra.mrb[0].mxu0 %v325
        %v479 = vpop.f32.mrb[0].mxu0
        %v480 = vadd.f32 0.0, %v479
        %v481 = vpop.f32.mrb[0].mxu0
        %482 = vmatprep.mubr.f32.mxu0 0.0
        %483 = vmatmul.mubr.f32.gmra.mrb[0].mxu0 %v326
        %v484 = vpop.f32.mrb[0].mxu0
        %v485 = vadd.f32 0.0, %v484
        %v486 = vpop.f32.mrb[0].mxu0
        %487 = vdwg.mxu0
        %v488 = vadd.f32 %v295, %v410
        %v489 = vadd.f32 %v296, %v415
        %v490 = vadd.f32 %v297, %v420
        %v491 = vadd.f32 %v298, %v425
        %v492 = vadd.f32 %v299, %v430
        %v493 = vadd.f32 %v300, %v435
        %v494 = vadd.f32 %v301, %v440
        %v495 = vadd.f32 %v302, %v445
        %v496 = vadd.f32 %v303, %v450
        %v497 = vadd.f32 %v304, %v455
        %v498 = vadd.f32 %v305, %v460
        %v499 = vadd.f32 %v306, %v465
        %v500 = vadd.f32 %v307, %v470
        %v501 = vadd.f32 %v308, %v475
        %v502 = vadd.f32 %v309, %v480
        %v503 = vadd.f32 %v310, %v485
        %504 = vst [vmem:[#allocation2] sm:$0xff] %v488
        %505 = vst [vmem:[#allocation2 + $0x8] sm:$0xff] %v489
        %506 = vst [vmem:[#allocation2 + $0x10] sm:$0xff] %v490
        %507 = vst [vmem:[#allocation2 + $0x18] sm:$0xff] %v491
        %508 = vst [vmem:[#allocation2 + $0x20] sm:$0xff] %v492
        %509 = vst [vmem:[#allocation2 + $0x28] sm:$0xff] %v493
        %510 = vst [vmem:[#allocation2 + $0x30] sm:$0xff] %v494
        %511 = vst [vmem:[#allocation2 + $0x38] sm:$0xff] %v495
        %512 = vst [vmem:[#allocation2 + $0x40] sm:$0xff] %v496
        %513 = vst [vmem:[#allocation2 + $0x48] sm:$0xff] %v497
        %514 = vst [vmem:[#allocation2 + $0x50] sm:$0xff] %v498
        %515 = vst [vmem:[#allocation2 + $0x58] sm:$0xff] %v499
        %516 = vst [vmem:[#allocation2 + $0x60] sm:$0xff] %v500
        %517 = vst [vmem:[#allocation2 + $0x68] sm:$0xff] %v501
        %518 = vst [vmem:[#allocation2 + $0x70] sm:$0xff] %v502
        %519 = vst [vmem:[#allocation2 + $0x78] sm:$0xff] %v503
        %p520 = scmp.eq.s32.totalorder %s30, 1
        // Predicated region
        $region45: #{tpu_custom_call.1} parent=31 // pred_check
          %p521 = pneg %p520
        $region46: #{tpu_custom_call.1} parent=31 // pred_check_branch
          %523 = sbr.rel (%p521) target = $region48
        $region47: #{tpu_custom_call.1} parent=31 // pred_region
          %v524 = vld [vmem:[#allocation2] sm:$0xff]
          %v525 = vld [vmem:[#allocation2 + $0x8] sm:$0xff]
          %v526 = vld [vmem:[#allocation2 + $0x10] sm:$0xff]
          %v527 = vld [vmem:[#allocation2 + $0x18] sm:$0xff]
          %v528 = vld [vmem:[#allocation2 + $0x20] sm:$0xff]
          %v529 = vld [vmem:[#allocation2 + $0x28] sm:$0xff]
          %v530 = vld [vmem:[#allocation2 + $0x30] sm:$0xff]
          %v531 = vld [vmem:[#allocation2 + $0x38] sm:$0xff]
          %v532 = vld [vmem:[#allocation2 + $0x40] sm:$0xff]
          %v533 = vld [vmem:[#allocation2 + $0x48] sm:$0xff]
          %v534 = vld [vmem:[#allocation2 + $0x50] sm:$0xff]
          %v535 = vld [vmem:[#allocation2 + $0x58] sm:$0xff]
          %v536 = vld [vmem:[#allocation2 + $0x60] sm:$0xff]
          %v537 = vld [vmem:[#allocation2 + $0x68] sm:$0xff]
          %v538 = vld [vmem:[#allocation2 + $0x70] sm:$0xff]
          %v539 = vld [vmem:[#allocation2 + $0x78] sm:$0xff]
          %v540 = vld [vmem:[%s273] sm:$0x1]
          %v542 = vlaneseq
          %v543 = vshrl.u32 %v542, 7
          %v544 = vsub.s32 0, %v543
          %v545 = vrot.slane %v540, %v544
          %v547 = vadd.f32 %v524, %v545
          %v548 = vadd.f32 %v525, %v545
          %v549 = vadd.f32 %v526, %v545
          %v550 = vadd.f32 %v527, %v545
          %v551 = vadd.f32 %v528, %v545
          %v552 = vadd.f32 %v529, %v545
          %v553 = vadd.f32 %v530, %v545
          %v554 = vadd.f32 %v531, %v545
          %v555 = vadd.f32 %v532, %v545
          %v556 = vadd.f32 %v533, %v545
          %v557 = vadd.f32 %v534, %v545
          %v558 = vadd.f32 %v535, %v545
          %v559 = vadd.f32 %v536, %v545
          %v560 = vadd.f32 %v537, %v545
          %v561 = vadd.f32 %v538, %v545
          %v562 = vadd.f32 %v539, %v545
          %v563 = vmul.f32 %v547, 1.442695
          %v564 = vpow.pop %v563
          %v565 = vmul.f32 %v548, 1.442695
          %v566 = vpow.pop %v565
          %v567 = vmul.f32 %v549, 1.442695
          %v568 = vpow.pop %v567
          %v569 = vmul.f32 %v550, 1.442695
          %v570 = vpow.pop %v569
          %v571 = vmul.f32 %v551, 1.442695
          %v572 = vpow.pop %v571
          %v573 = vmul.f32 %v552, 1.442695
          %v574 = vpow.pop %v573
          %v575 = vmul.f32 %v553, 1.442695
          %v576 = vpow.pop %v575
          %v577 = vmul.f32 %v554, 1.442695
          %v578 = vpow.pop %v577
          %v579 = vmul.f32 %v555, 1.442695
          %v580 = vpow.pop %v579
          %v581 = vmul.f32 %v556, 1.442695
          %v582 = vpow.pop %v581
          %v583 = vmul.f32 %v557, 1.442695
          %v584 = vpow.pop %v583
          %v585 = vmul.f32 %v558, 1.442695
          %v586 = vpow.pop %v585
          %v587 = vmul.f32 %v559, 1.442695
          %v588 = vpow.pop %v587
          %v589 = vmul.f32 %v560, 1.442695
          %v590 = vpow.pop %v589
          %v591 = vmul.f32 %v561, 1.442695
          %v592 = vpow.pop %v591
          %v593 = vmul.f32 %v562, 1.442695
          %v594 = vpow.pop %v593
          %595 = vst [vmem:[%s268] sm:$0xff] %v564
          %596 = vst [vmem:[%s268 + $0x8] sm:$0xff] %v566
          %597 = vst [vmem:[%s268 + $0x10] sm:$0xff] %v568
          %598 = vst [vmem:[%s268 + $0x18] sm:$0xff] %v570
          %599 = vst [vmem:[%s268 + $0x20] sm:$0xff] %v572
          %600 = vst [vmem:[%s268 + $0x28] sm:$0xff] %v574
          %601 = vst [vmem:[%s268 + $0x30] sm:$0xff] %v576
          %602 = vst [vmem:[%s268 + $0x38] sm:$0xff] %v578
          %603 = vst [vmem:[%s268 + $0x40] sm:$0xff] %v580
          %604 = vst [vmem:[%s268 + $0x48] sm:$0xff] %v582
          %605 = vst [vmem:[%s268 + $0x50] sm:$0xff] %v584
          %606 = vst [vmem:[%s268 + $0x58] sm:$0xff] %v586
          %607 = vst [vmem:[%s268 + $0x60] sm:$0xff] %v588
          %608 = vst [vmem:[%s268 + $0x68] sm:$0xff] %v590
          %609 = vst [vmem:[%s268 + $0x70] sm:$0xff] %v592
          %610 = vst [vmem:[%s268 + $0x78] sm:$0xff] %v594
        $region48: #{tpu_custom_call.1} parent=31 // pred_fallthru
          _
        %s611 = sand.u32 %s134, 1
        %s612 = scalar_lea.sflag [#allocation5], %s611
        %s613 = sand.u32 %s134, 1
        %s614 = smul.addr %s613, 128
        %s615 = scalar_lea.vmem [#allocation8], %s614
        // Predicated region
        $region49: #{tpu_custom_call.1} parent=31 // pred_check
          %p616 = pneg %p144
        $region50: #{tpu_custom_call.1} parent=31 // pred_check_branch
          %618 = sbr.rel (%p616) target = $region52
        $region51: #{tpu_custom_call.1} parent=31 // pred_region
          %s619 = smul.u32 16, %s28
          %s621 = ssub.s32 2048, 2048
          %622 = vsyncadd %s612, %s621
          %s623 = smul.addr %s619, 2
          %s624 = sadd.s32 %s29, %s623
          %s625 = smul.addr %s624, 128
          %s626 = scalar_lea.hbm %s3, %s625
          %s627 = sshll.u32 %s615, 4
          %s628 = int_to_ptr.vmem [resolvable:$true] %s627
          %633 = dma.vmem_to_hbm [thread:$0]  %s628, 2048, %s626, %s612, 128, 256, 8
        $region52: #{tpu_custom_call.1} parent=31 // pred_fallthru
          _
      $region32: #{tpu_custom_call.1} parent=5 // pred_fallthru
        _
      %p634 = scmp.le.s32.totalorder 2, %s18
      // Predicated region
      $region53: #{tpu_custom_call.1} parent=5 // pred_check
        %p635 = pneg %p634
      $region54: #{tpu_custom_call.1} parent=5 // pred_check_branch
        %637 = sbr.rel (%p635) target = $region56
      $region55: #{tpu_custom_call.1} parent=5 // pred_region
        %s638 = ssub.s32 %s18, 2
        // Predicated region
        $region57: #{tpu_custom_call.1} parent=55 // pred_check
          %p639 = pneg %p150
        $region58: #{tpu_custom_call.1} parent=55 // pred_check_branch
          %641 = sbr.rel (%p639) target = $region60
        $region59: #{tpu_custom_call.1} parent=55 // pred_region
          %s642 = sand.u32 %s135, 1
          %s643 = scalar_lea.sflag [#allocation5], %s642
          %s644 = sand.u32 %s135, 1
          %s645 = smul.addr %s644, 128
          %s646 = scalar_lea.vmem [#allocation8], %s645
          %647 = dma.done %s643, 2048
        $region60: #{tpu_custom_call.1} parent=55 // pred_fallthru
          _
      $region56: #{tpu_custom_call.1} parent=5 // pred_fallthru
        _
    $region6: #{tpu_custom_call.1} parent=1 // loop_footer
      %s22 = sadd.s32 1, %s18
    $region7: #{tpu_custom_call.1} parent=1 // loop_footer_branch
      %17 = sbr.rel target = $region3
    $region8: #{tpu_custom_call.1} parent=1 // loop_exit
      _
    %648 = vsyncpa [#allocation4], 1
    %s649 = scalar_lea.sflag [#allocation4], 1
    %650 = vsyncpa %s649, 1
    %651 = vsyncpa [#allocation7], 1
    %s652 = scalar_lea.sflag [#allocation7], 1
    %653 = vsyncpa %s652, 1
    %654 = vsyncpa [#allocation5], 1
    %s655 = scalar_lea.sflag [#allocation5], 1
    %656 = vsyncpa %s655, 1

</llo_original>
